<compile_context>
chip_gen: v7x
topology: tpu7x:2x2x1
jax: 0.10.0
libtpu: 0.0.40
codegen_flags: <defaults>
</compile_context>

<pallas_src>
import jax
import jax.numpy as jnp
from jax.experimental import pallas as pl
from jax.experimental.pallas import tpu as pltpu

_LANE = 128
_MIN_SUBLANE = 8
_PACKED_SUBLANE = 32            # bool / int8 pack 32 sublanes per vreg
_TILE_BYTE_BUDGET = 3 << 20     # ~3 MiB/tile; (in + out) double-buffered < 16 MiB


def _threshold_kernel(bias_ref, p_ref, x_ref, o_ref):
    # bias_ref: (1, 1) f32 in SMEM; p_ref: (br, 1) f32; x_ref/o_ref: (br, bc).
    z = (x_ref[...].astype(jnp.float32) + bias_ref[0, 0]) * p_ref[...]
    # sigmoid(z) == 0.5 * tanh(0.5 * z) + 0.5  -> single EUP op per element.
    o_ref[...] = (0.5 * jnp.tanh(0.5 * z) + 0.5).astype(o_ref.dtype)


def _binary_kernel(x_ref, o_ref):
    o_ref[...] = x_ref[...] > 0


def _select_tiles(rows, cols, itemsize, row_quantum):
    """Pick (br, bc) with br a multiple of row_quantum (or == rows) and bc a
    multiple of 128 (or == cols), targeting ~_TILE_BYTE_BUDGET per tile."""
    budget = _TILE_BYTE_BUDGET
    # Column (lane) tile: full row width if one minimal strip fits the budget.
    if row_quantum * cols * itemsize <= budget:
        bc = cols                                    # full-dim block: contiguous DMA
    else:
        bc = max(_LANE, (budget // (row_quantum * itemsize)) // _LANE * _LANE)
    # Row (sublane) tile: as many quanta as fit the budget.
    br = max(row_quantum, (budget // (bc * itemsize)) // row_quantum * row_quantum)
    if br >= rows:
        if rows >= 2 * row_quantum:
            # Whole array fits one block; split into >=2 row blocks so v7x's
            # two TensorCores both get work.
            br = pl.cdiv(pl.cdiv(rows, 2), row_quantum) * row_quantum
        else:
            br = rows                                # full-dim row block
    return br, bc


def _grid_and_maps(rows, cols, br, bc):
    if bc == cols:
        grid = (pl.cdiv(rows, br),)
        semantics = ("parallel",)
        imap = lambda i: (i, 0)
        pmap = lambda i: (i, 0)
    else:
        grid = (pl.cdiv(rows, br), pl.cdiv(cols, bc))
        semantics = ("parallel", "parallel")
        imap = lambda i, j: (i, j)
        pmap = lambda i, j: (i, 0)
    return grid, semantics, imap, pmap


def threshold_layer_forward(x_nchw, P_, bias=0.0, binary_mode=False):
    """Pallas implementation of ThresholdLayer.forward (axis_channels=1, NCHW)."""
    N, C, H, W = x_nchw.shape
    rows, cols = N * C, H * W
    x2 = x_nchw.reshape(rows, cols)            # contiguous reshape, no HBM transpose
    itemsize = jnp.dtype(x2.dtype).itemsize

    if binary_mode:
        br, bc = _select_tiles(rows, cols, itemsize, _PACKED_SUBLANE)
        grid, semantics, imap, _ = _grid_and_maps(rows, cols, br, bc)
        out2 = pl.pallas_call(
            _binary_kernel,
            out_shape=jax.ShapeDtypeStruct((rows, cols), jnp.bool_),
            grid=grid,
            in_specs=[pl.BlockSpec((br, bc), imap)],
            out_specs=pl.BlockSpec((br, bc), imap),
            compiler_params=pltpu.CompilerParams(dimension_semantics=semantics),
        )(x2)
        return out2.reshape(N, C, H, W)

    row_quantum = max(_MIN_SUBLANE, 32 // itemsize)   # f32 -> 8, bf16 -> 16
    br, bc = _select_tiles(rows, cols, itemsize, row_quantum)
    grid, semantics, imap, pmap = _grid_and_maps(rows, cols, br, bc)

    # Per-row scale: row = n*C + c  ->  P_[c]; tiny (rows, 1) f32 side input.
    p_row = jnp.tile(P_.astype(jnp.float32), N).reshape(rows, 1)
    bias_arr = jnp.asarray(bias, dtype=jnp.float32).reshape(1, 1)

    out2 = pl.pallas_call(
        _threshold_kernel,
        out_shape=jax.ShapeDtypeStruct((rows, cols), x2.dtype),
        grid=grid,
        in_specs=[
            pl.BlockSpec(memory_space=pltpu.MemorySpace.SMEM),   # bias scalar
            pl.BlockSpec((br, 1), pmap),                         # per-row P_
            pl.BlockSpec((br, bc), imap),                        # x tile
        ],
        out_specs=pl.BlockSpec((br, bc), imap),
        compiler_params=pltpu.CompilerParams(dimension_semantics=semantics),
    )(bias_arr, p_row, x2)
    return out2.reshape(N, C, H, W)


if __name__ == "__main__":
    key = jax.random.PRNGKey(0)
    k0, k1 = jax.random.split(key)

    def ref_forward(x, P_, bias):
        C = x.shape[1]
        return jax.nn.sigmoid((x + bias) * P_.reshape(1, C, 1, 1))

    # --- Small aligned case: (2, 4, 16, 16) -> lane-dense full-width block. ---
    N, C, H, W = 2, 4, 16, 16
    x = jax.random.normal(k0, (N, C, H, W), dtype=jnp.float32)
    P_ = jnp.arange(1, C + 1, dtype=jnp.float32) * 0.5
    bias = 0.5

    y = jax.block_until_ready(threshold_layer_forward(x, P_, bias=bias))
    assert y.shape == (N, C, H, W) and y.dtype == jnp.float32
    assert jnp.allclose(y, ref_forward(x, P_, bias), atol=1e-5, rtol=1e-5)

    yb = jax.block_until_ready(
        threshold_layer_forward(x, P_, bias=bias, binary_mode=True))
    assert yb.dtype == jnp.bool_ and jnp.array_equal(yb, x > 0)

    # --- Unaligned, multi-block case: rows=24, cols=660 (neither a multiple
    #     of (8, 128)); exercises the cdiv grid and the ragged tail block. ---
    N2, C2, H2, W2 = 4, 6, 20, 33
    x_u = jax.random.normal(k1, (N2, C2, H2, W2), dtype=jnp.float32)
    P2 = jnp.arange(1, C2 + 1, dtype=jnp.float32) * 0.3
    bias2 = -0.2

    y2 = jax.block_until_ready(threshold_layer_forward(x_u, P2, bias=bias2))
    assert jnp.allclose(y2, ref_forward(x_u, P2, bias2), atol=1e-5, rtol=1e-5)

    yb2 = jax.block_until_ready(
        threshold_layer_forward(x_u, P2, bias=bias2, binary_mode=True))
    assert jnp.array_equal(yb2, x_u > 0)

    # TODO(synk): forward_inverse / threshold_inverse_fn not implemented
    # (not part of forward()); threshold_fn fixed to sigmoid here.
    print("KERNEL_OK")
</pallas_src>

<mosaic_0001>
module attributes {stable_mosaic.version = 11 : i64} {
  func.func @_threshold_kernel(%arg0: i32, %arg1: memref<1x1xf32, #tpu.memory_space<smem>>, %arg2: memref<8x1xf32, #tpu.memory_space<vmem>>, %arg3: memref<8x256xf32, #tpu.memory_space<vmem>>, %arg4: memref<8x256xf32, #tpu.memory_space<vmem>>) attributes {dimension_semantics = [#tpu.dimension_semantics<parallel>], iteration_bounds = array<i64: 1>, scalar_prefetch = 0 : i64, scratch_operands = 0 : i64, tpu.core_type = #tpu.core_type<tc>, window_params = [{transform_indices = @transform_0, window_bounds = array<i64: 1, 1>}, {transform_indices = @transform_1, window_bounds = array<i64: 8, 1>}, {transform_indices = @transform_2, window_bounds = array<i64: 8, 256>}, {transform_indices = @transform_3, window_bounds = array<i64: 8, 256>}]} {
    %c0 = arith.constant 0 : index
    %c0_0 = arith.constant 0 : index
    %0 = vector.load %arg3[%c0, %c0_0] : memref<8x256xf32, #tpu.memory_space<vmem>>, vector<8x256xf32>
    %c0_1 = arith.constant 0 : index
    %c0_2 = arith.constant 0 : index
    %1 = memref.load %arg1[%c0_1, %c0_2] : memref<1x1xf32, #tpu.memory_space<smem>>
    %2 = vector.broadcast %1 : f32 to vector<8x256xf32>
    %3 = arith.addf %0, %2 : vector<8x256xf32>
    %c0_3 = arith.constant 0 : index
    %c0_4 = arith.constant 0 : index
    %4 = vector.load %arg2[%c0_3, %c0_4] : memref<8x1xf32, #tpu.memory_space<vmem>>, vector<8x1xf32>
    %5 = vector.broadcast %4 : vector<8x1xf32> to vector<8x256xf32>
    %6 = arith.mulf %3, %5 : vector<8x256xf32>
    %cst = arith.constant 5.000000e-01 : f32
    %7 = vector.broadcast %cst : f32 to vector<8x256xf32>
    %8 = arith.mulf %7, %6 : vector<8x256xf32>
    %9 = math.tanh %8 : vector<8x256xf32>
    %cst_5 = arith.constant 5.000000e-01 : f32
    %10 = vector.broadcast %cst_5 : f32 to vector<8x256xf32>
    %11 = arith.mulf %10, %9 : vector<8x256xf32>
    %cst_6 = arith.constant 5.000000e-01 : f32
    %12 = vector.broadcast %cst_6 : f32 to vector<8x256xf32>
    %13 = arith.addf %11, %12 : vector<8x256xf32>
    %c0_7 = arith.constant 0 : index
    %c0_8 = arith.constant 0 : index
    %14 = vector.load %arg4[%c0_7, %c0_8] : memref<8x256xf32, #tpu.memory_space<vmem>>, vector<8x256xf32>
    tpu.vector_store %arg4[%c0_7, %c0_8], %13 {strides = array<i32>} : memref<8x256xf32, #tpu.memory_space<vmem>>, vector<8x256xf32>,
    return
  }
  func.func @transform_0(%arg0: i32) -> (i32, i32) {
    %c0_i32 = arith.constant 0 : i32
    %c0_i32_0 = arith.constant 0 : i32
    %c0_i32_1 = arith.constant 0 : i32
    return %c0_i32, %c0_i32_0 : i32, i32
  }
  func.func @transform_1(%arg0: i32) -> (i32, i32) {
    %c0_i32 = arith.constant 0 : i32
    %c0_i32_0 = arith.constant 0 : i32
    return %arg0, %c0_i32 : i32, i32
  }
  func.func @transform_2(%arg0: i32) -> (i32, i32) {
    %c0_i32 = arith.constant 0 : i32
    %c0_i32_0 = arith.constant 0 : i32
    return %arg0, %c0_i32 : i32, i32
  }
  func.func @transform_3(%arg0: i32) -> (i32, i32) {
    %c0_i32 = arith.constant 0 : i32
    %c0_i32_0 = arith.constant 0 : i32
    return %arg0, %c0_i32 : i32, i32
  }
}

</mosaic_0001>

<llo_original>
// kernel: tpu_custom_call.1
$region0: #{tpu_custom_call.1}
  #allocation0 [shape = 'u32[]', space=smem, size = 0x4, offset = 0x4, fixed_abs, tag = 'smem constant byte address 0x4 - core index']
  #allocation1 [shape = 'u32[144,128]{1,0:T(1,128)}', space=vmem, size = 0x12000, scoped, tag = 'internal scratch']
  #allocation2 [shape = 'f32[1,1]{1,0:T(1,128)S(6)}', space=smem, size = 0x200, scoped, tag = 'scoped memory for tpu_custom_call.1']
  %s0 = inlined_call_operand.<no memory space> [shape: f32[1,1], index: 0, kind: input, shape index: {}]
  %s1 = inlined_call_operand.vmem [shape: f32[8,1], index: 1, kind: input, shape index: {}]
  %s2 = inlined_call_operand.vmem [shape: f32[8,256], index: 2, kind: input, shape index: {}]
  %s3 = inlined_call_operand.hbm [shape: f32[8,256], index: 3, kind: output, shape index: {}]
  %s4 = sld [smem:[#allocation0]]
  $region22: #{tpu_custom_call.1} parent=0
    _
  %s6 = ssub.s32 1, %s4
  %s7 = scalar_select 0, %s6, %s4
  %8 = sst [smem:[#allocation2]] %s0
  $region1: #{tpu_custom_call.1} parent=0
    #allocation3 [shape = 'u8[8192]{0}', space=vmem, size = 0x2000, scoped, tag = 'output window, operand 0, single buffered']
    #allocation4 [shape = 's32[1]{0}', space=sflag, size = 0x4, scoped, tag = 'scoped memory for tpu_custom_call.1']
    %9 = vsyncpa [#allocation4], 0
    // Predicated region
    $region2: #{tpu_custom_call.1} parent=1 // pred_check
      _
    $region3: #{tpu_custom_call.1} parent=1 // pred_check_branch
      %11 = sbr.rel (0) target = $region5
    $region4: #{tpu_custom_call.1} parent=1 // pred_region
      _
    $region5: #{tpu_custom_call.1} parent=1 // pred_fallthru
      _
    // Predicated region
    $region6: #{tpu_custom_call.1} parent=1 // pred_check
      _
    $region7: #{tpu_custom_call.1} parent=1 // pred_check_branch
      %13 = sbr.rel (0) target = $region9
    $region8: #{tpu_custom_call.1} parent=1 // pred_region
      _
    $region9: #{tpu_custom_call.1} parent=1 // pred_fallthru
      _
    // Predicated region
    $region10: #{tpu_custom_call.1} parent=1 // pred_check
      _
    $region11: #{tpu_custom_call.1} parent=1 // pred_check_branch
      %15 = sbr.rel (0) target = $region13
    $region12: #{tpu_custom_call.1} parent=1 // pred_region
      _
    $region13: #{tpu_custom_call.1} parent=1 // pred_fallthru
      _
    %v16 = vld [vmem:[%s2] sm:$0xff]
    %v17 = vld [vmem:[%s2 + $0x8] sm:$0xff]
    %s18 = sld [smem:[#allocation2]]
    %v19 = vstv %s18
    %v20 = vadd.f32 %v16, %v19
    %v21 = vadd.f32 %v17, %v19
    %v22 = vld [vmem:[%s1] sm:$0xff]
    %24 = vset.pattern.permute.xlu0 0
    %25 = vperm.xlu0 %24, %v22
    %v26 = vpop.permute.xlu0 %25
    %v28 = vmul.f32 %v20, %v26
    %v29 = vmul.f32 %v21, %v26
    %v30 = vmul.f32 %v28, 0.5
    %v31 = vmul.f32 %v29, 0.5
    %v32 = vtanh.pop %v30
    %v33 = vtanh.pop %v31
    %v34 = vmul.f32 %v32, 0.5
    %v35 = vmul.f32 %v33, 0.5
    %v36 = vadd.f32 %v34, 0.5
    %v37 = vadd.f32 %v35, 0.5
    %38 = vst [vmem:[#allocation3] sm:$0xff] %v36
    %39 = vst [vmem:[#allocation3 + $0x8] sm:$0xff] %v37
    // Predicated region
    $region14: #{tpu_custom_call.1} parent=1 // pred_check
      _
    $region15: #{tpu_custom_call.1} parent=1 // pred_check_branch
      %41 = sbr.rel (0) target = $region17
    $region16: #{tpu_custom_call.1} parent=1 // pred_region
      %s43 = ssub.s32 256, 256
      %44 = vsyncadd [#allocation4], %s43
      %s46 = sshll.u32 [#allocation3], 4
      %s47 = int_to_ptr.vmem [resolvable:$true] %s46
      %49 = dma.vmem_to_hbm [thread:$0]  %s47, 256, %s3, [#allocation4]
    $region17: #{tpu_custom_call.1} parent=1 // pred_fallthru
      _
    // Predicated region
    $region18: #{tpu_custom_call.1} parent=1 // pred_check
      _
    $region19: #{tpu_custom_call.1} parent=1 // pred_check_branch
      %51 = sbr.rel (0) target = $region21
    $region20: #{tpu_custom_call.1} parent=1 // pred_region
      %52 = dma.done [#allocation4], 256
    $region21: #{tpu_custom_call.1} parent=1 // pred_fallthru
      _
    %53 = vsyncpa [#allocation4], 1

</llo_original>
